<compile_context>
chip_gen: v7x
topology: tpu7x:2x2x1
jax: 0.10.0
libtpu: 0.0.40
codegen_flags: <defaults>
</compile_context>

<pallas_src>
import functools

import jax
import jax.numpy as jnp
from jax.experimental import pallas as pl
from jax.experimental.pallas import tpu as pltpu


def _round_up(x, m):
    return ((x + m - 1) // m) * m


def _vmem_capacity_bytes():
    """Physical VMEM of the current TPU generation (conservative fallback)."""
    try:
        info = pltpu.get_tpu_info()
        for attr in ("vmem_capacity_bytes", "vmem_size_bytes", "vmem_bytes"):
            v = getattr(info, attr, None)
            if v:
                return int(v)
    except Exception:
        pass
    return 64 * 1024 * 1024  # v7x-sized fallback (safe lower bound)


def _pick_ff_tile(d_ff128, tf_target):
    """Largest multiple of 128 that divides d_ff128 and is <= tf_target."""
    n = d_ff128 // 128
    best = 1
    for g in range(1, n + 1):
        if n % g == 0 and g * 128 <= max(128, tf_target):
            best = g
    return best * 128


# --------------------------------------------------------------------------- #
# Kernels
# --------------------------------------------------------------------------- #
def _ffn_resident_kernel(x_ref, w1_ref, b1_ref, w2_ref, b2_ref, o_ref, *,
                         compute_dtype):
    """1-D grid over row tiles; W1/W2/b1/b2 are grid-invariant (VMEM-resident)."""
    x = x_ref[...].astype(compute_dtype)
    h = jnp.dot(x, w1_ref[...].astype(compute_dtype),
                preferred_element_type=jnp.float32)
    h = jnp.maximum(h + b1_ref[...].astype(jnp.float32), 0.0)
    y = jnp.dot(h.astype(compute_dtype), w2_ref[...].astype(compute_dtype),
                preferred_element_type=jnp.float32)
    o_ref[...] = (y + b2_ref[...].astype(jnp.float32)).astype(o_ref.dtype)


def _ffn_tiled_kernel(x_ref, w1_ref, b1_ref, w2_ref, b2_ref, o_ref, acc_ref, *,
                      compute_dtype):
    """2-D grid: (i row tiles [parallel], k d_ff tiles [arbitrary/reduction])."""
    k = pl.program_id(1)

    @pl.when(k == 0)
    def _():
        # Fold b2 into the accumulator init (broadcast hoisted out of the loop).
        acc_ref[...] = jnp.broadcast_to(b2_ref[...].astype(jnp.float32),
                                        acc_ref.shape)

    x = x_ref[...].astype(compute_dtype)
    h = jnp.dot(x, w1_ref[...].astype(compute_dtype),
                preferred_element_type=jnp.float32)
    h = jnp.maximum(h + b1_ref[...].astype(jnp.float32), 0.0)
    acc_ref[...] += jnp.dot(h.astype(compute_dtype),
                            w2_ref[...].astype(compute_dtype),
                            preferred_element_type=jnp.float32)

    @pl.when(k == pl.num_programs(1) - 1)
    def _():
        o_ref[...] = acc_ref[...].astype(o_ref.dtype)


# --------------------------------------------------------------------------- #
# Wrapper
# --------------------------------------------------------------------------- #
def positionwise_feed_forward(x, w1, b1, w2, b2, *, tm=None, tf=None,
                              compute_dtype=jnp.bfloat16, force_tiled=False):
    """FFN(x) = max(0, x@W1 + b1) @ W2 + b2  (dropout = eval-mode identity).

    x:  (batch, seq, d_model)
    w1: (d_model, d_ff), b1: (d_ff,)
    w2: (d_ff, d_model), b2: (d_model,)
    Returns (batch, seq, d_model) in x.dtype.
    """
    batch, seq, d_model = x.shape
    d_ff = w1.shape[1]
    out_dtype = x.dtype
    M = batch * seq

    xbytes = jnp.dtype(x.dtype).itemsize
    wbytes = jnp.dtype(w1.dtype).itemsize
    obytes = jnp.dtype(out_dtype).itemsize
    cbytes = jnp.dtype(compute_dtype).itemsize

    # --- Generation-aware VMEM budget ----------------------------------------
    vmem_cap = _vmem_capacity_bytes()
    vmem_limit = int(0.75 * vmem_cap)   # ~96 MiB on v5e/v6e, ~48 MiB on v7x
    budget = int(0.9 * vmem_limit)      # headroom for compiler scratch/pipeline

    # d_ff only padded to lane granularity (no over-padding).
    d_ff128 = _round_up(d_ff, 128)

    # --- Row tile (generation-aware, clamped to M / VMEM) --------------------
    if tm is None:
        # v5e/v6e (128 MiB VMEM, lower HBM BW relative to MXU) -> bigger tiles.
        tm = 1024 if vmem_cap >= 100 * 1024 * 1024 else 512
    tm = max(8, min(tm, _round_up(M, 8)))
    # Keep both v7x TensorCores busy on mid-size M (>=2 parallel row tiles).
    if M > 512 and pl.cdiv(M, tm) < 2:
        tm = _round_up(pl.cdiv(M, 2), 8)

    # --- Choose resident-weight path vs. d_ff-tiled fallback -----------------
    bias_foot = 2 * 2 * (d_ff128 + d_model) * 4       # double-buffered f32 rows
    res_w = 2 * 2 * d_model * d_ff128 * wbytes + bias_foot   # W1+W2 (2-deep, conservative)

    def resident_foot(tm_):
        return (res_w
                + 2 * tm_ * d_model * (xbytes + obytes)   # x / out double buffers
                + tm_ * d_ff128 * (4 + cbytes)            # h (f32) + bf16 cast copy
                + tm_ * d_model * 4)                      # y (f32) before cast

    use_resident = (not force_tiled) and resident_foot(tm) <= budget
    if (not force_tiled) and not use_resident:
        # Prefer shrinking tm over re-streaming the weights: resident weights
        # remove the dominant HBM traffic, so a smaller row tile is the better trade.
        t = tm
        while t > 256 and resident_foot(t) > budget:
            t //= 2
        if resident_foot(t) <= budget:
            tm, use_resident = max(8, min(t, _round_up(M, 8))), True

    if not use_resident:
        if tf is None:
            tf = 512
        tf = _pick_ff_tile(d_ff128, tf)

        def tiled_foot(tm_):
            return (2 * 2 * d_model * tf * wbytes + 2 * 2 * (tf + d_model) * 4
                    + 2 * tm_ * d_model * (xbytes + obytes)
                    + tm_ * d_model * 4                    # f32 accumulator
                    + tm_ * tf * (4 + cbytes))             # h + cast copy
        while tm > 256 and tiled_foot(tm) > budget:
            tm //= 2
        tm = max(8, min(tm, _round_up(M, 8)))

    # --- Operand prep (no host pass over x; weights padded only if needed) ---
    x2d = x.reshape(M, d_model)                      # metadata-only reshape
    b1p = b1.astype(jnp.float32).reshape(1, d_ff)
    b2p = b2.astype(jnp.float32).reshape(1, d_model)
    w1p, w2p = w1, w2
    if d_ff128 != d_ff:
        pad = d_ff128 - d_ff
        # Zero-padded hidden units: relu(x@0 + 0) = 0 and their W2 rows are 0,
        # so they contribute exactly nothing.
        w1p = jnp.pad(w1, ((0, 0), (0, pad)))
        b1p = jnp.pad(b1p, ((0, 0), (0, pad)))
        w2p = jnp.pad(w2, ((0, pad), (0, 0)))

    n_m = pl.cdiv(M, tm)
    flops = 4 * M * d_model * d_ff                   # two GEMMs

    if use_resident:
        kernel = functools.partial(_ffn_resident_kernel,
                                   compute_dtype=compute_dtype)
        cost = pl.CostEstimate(
            flops=flops, transcendentals=0,
            bytes_accessed=int(M * d_model * (xbytes + obytes)
                               + 2 * d_model * d_ff128 * wbytes   # weights once
                               + (d_ff128 + d_model) * 4))
        out = pl.pallas_call(
            kernel,
            out_shape=jax.ShapeDtypeStruct((M, d_model), out_dtype),
            grid_spec=pltpu.PrefetchScalarGridSpec(
                num_scalar_prefetch=0,
                grid=(n_m,),
                in_specs=[
                    pl.BlockSpec((tm, d_model), lambda i: (i, 0)),        # x rows
                    pl.BlockSpec((d_model, d_ff128), lambda i: (0, 0)),   # W1 (invariant)
                    pl.BlockSpec((1, d_ff128), lambda i: (0, 0)),         # b1 (invariant)
                    pl.BlockSpec((d_ff128, d_model), lambda i: (0, 0)),   # W2 (invariant)
                    pl.BlockSpec((1, d_model), lambda i: (0, 0)),         # b2 (invariant)
                ],
                out_specs=pl.BlockSpec((tm, d_model), lambda i: (i, 0)),
            ),
            compiler_params=pltpu.CompilerParams(
                dimension_semantics=("parallel",),
                vmem_limit_bytes=vmem_limit,
            ),
            cost_estimate=cost,
        )(x2d, w1p, b1p, w2p, b2p)
    else:
        n_k = d_ff128 // tf
        kernel = functools.partial(_ffn_tiled_kernel,
                                   compute_dtype=compute_dtype)
        cost = pl.CostEstimate(
            flops=flops, transcendentals=0,
            bytes_accessed=int(M * d_model * (xbytes + obytes)
                               + n_m * 2 * d_model * d_ff128 * wbytes  # re-streamed
                               + n_m * (d_ff128 + d_model) * 4))
        out = pl.pallas_call(
            kernel,
            out_shape=jax.ShapeDtypeStruct((M, d_model), out_dtype),
            grid_spec=pltpu.PrefetchScalarGridSpec(
                num_scalar_prefetch=0,
                grid=(n_m, n_k),
                in_specs=[
                    pl.BlockSpec((tm, d_model), lambda i, k: (i, 0)),   # x rows
                    pl.BlockSpec((d_model, tf), lambda i, k: (0, k)),   # W1 d_ff tile
                    pl.BlockSpec((1, tf), lambda i, k: (0, k)),         # b1 d_ff tile
                    pl.BlockSpec((tf, d_model), lambda i, k: (k, 0)),   # W2 d_ff tile
                    pl.BlockSpec((1, d_model), lambda i, k: (0, 0)),    # b2 (invariant)
                ],
                out_specs=pl.BlockSpec((tm, d_model), lambda i, k: (i, 0)),
                scratch_shapes=[pltpu.VMEM((tm, d_model), jnp.float32)],
            ),
            compiler_params=pltpu.CompilerParams(
                dimension_semantics=("parallel", "arbitrary"),
                vmem_limit_bytes=vmem_limit,
            ),
            cost_estimate=cost,
        )(x2d, w1p, b1p, w2p, b2p)

    # Partial final row tile (if any) is masked by Pallas on store.
    return out.reshape(batch, seq, d_model)


# --------------------------------------------------------------------------- #
# Reference (mimics the kernel's precision policy)
# --------------------------------------------------------------------------- #
def _ref_ffn(x, w1, b1, w2, b2, compute_dtype=jnp.bfloat16):
    f32 = jnp.float32
    xc = x.astype(compute_dtype).astype(f32)
    w1c = w1.astype(compute_dtype).astype(f32)
    w2c = w2.astype(compute_dtype).astype(f32)
    hi = jnp.einsum("bsd,df->bsf", xc, w1c,
                    precision=jax.lax.Precision.HIGHEST) + b1.astype(f32)
    h = jnp.maximum(hi, 0.0).astype(compute_dtype).astype(f32)
    y = jnp.einsum("bsf,fd->bsd", h, w2c,
                   precision=jax.lax.Precision.HIGHEST) + b2.astype(f32)
    return y.astype(x.dtype)


def _make_params(key, d_model, d_ff):
    kw1, kb1, kw2, kb2 = jax.random.split(key, 4)
    w1 = jax.random.uniform(kw1, (d_model, d_ff), jnp.float32,
                            -1.0 / jnp.sqrt(d_model), 1.0 / jnp.sqrt(d_model))
    b1 = jax.random.uniform(kb1, (d_ff,), jnp.float32,
                            -1.0 / jnp.sqrt(d_model), 1.0 / jnp.sqrt(d_model))
    w2 = jax.random.uniform(kw2, (d_ff, d_model), jnp.float32,
                            -1.0 / jnp.sqrt(d_ff), 1.0 / jnp.sqrt(d_ff))
    b2 = jax.random.uniform(kb2, (d_model,), jnp.float32,
                            -1.0 / jnp.sqrt(d_ff), 1.0 / jnp.sqrt(d_ff))
    # Cache bf16 weights once (per the perf review: no per-call cast pass).
    return w1.astype(jnp.bfloat16), b1, w2.astype(jnp.bfloat16), b2


if __name__ == "__main__":
    key = jax.random.PRNGKey(0)
    k0, k1, k2, k3, k4, k5 = jax.random.split(key, 6)

    # --- Test 1: resident-weight path, non-128-multiple d_ff (padding path). --
    batch, seq, d_model, d_ff = 2, 8, 64, 96
    x = jax.random.normal(k0, (batch, seq, d_model), dtype=jnp.float32)
    w1, b1, w2, b2 = _make_params(k1, d_model, d_ff)
    y = jax.block_until_ready(positionwise_feed_forward(x, w1, b1, w2, b2))
    y_ref = _ref_ffn(x, w1, b1, w2, b2)
    assert y.shape == (batch, seq, d_model)
    assert jnp.allclose(y, y_ref, atol=2e-2, rtol=2e-2), "mismatch (resident path)"

    # --- Test 2: forced d_ff-tiled fallback, multiple M and k tiles. ----------
    batch, seq, d_model, d_ff = 2, 32, 128, 256
    x = jax.random.normal(k2, (batch, seq, d_model), dtype=jnp.float32)
    w1, b1, w2, b2 = _make_params(k3, d_model, d_ff)
    y = jax.block_until_ready(
        positionwise_feed_forward(x, w1, b1, w2, b2, tm=32, tf=128,
                                  force_tiled=True))
    y_ref = _ref_ffn(x, w1, b1, w2, b2)
    assert y.shape == (batch, seq, d_model)
    assert jnp.allclose(y, y_ref, atol=2e-2, rtol=2e-2), "mismatch (tiled path)"

    # --- Test 3: partial final row tile (M not a multiple of tm, no host pad).
    batch, seq, d_model, d_ff = 1, 20, 64, 128
    x = jax.random.normal(k4, (batch, seq, d_model), dtype=jnp.float32)
    w1, b1, w2, b2 = _make_params(k5, d_model, d_ff)
    y = jax.block_until_ready(positionwise_feed_forward(x, w1, b1, w2, b2, tm=16))
    y_ref = _ref_ffn(x, w1, b1, w2, b2)
    assert y.shape == (batch, seq, d_model)
    assert jnp.allclose(y, y_ref, atol=2e-2, rtol=2e-2), "mismatch (partial tile)"

    print("KERNEL_OK")
</pallas_src>

<mosaic_0001>
module attributes {stable_mosaic.version = 11 : i64} {
  func.func @_ffn_resident_kernel(%arg0: i32, %arg1: memref<16x64xf32, #tpu.memory_space<vmem>>, %arg2: memref<64x128xbf16, #tpu.memory_space<vmem>>, %arg3: memref<1x128xf32, #tpu.memory_space<vmem>>, %arg4: memref<128x64xbf16, #tpu.memory_space<vmem>>, %arg5: memref<1x64xf32, #tpu.memory_space<vmem>>, %arg6: memref<16x64xf32, #tpu.memory_space<vmem>>) attributes {dimension_semantics = [#tpu.dimension_semantics<parallel>], iteration_bounds = array<i64: 1>, scalar_prefetch = 0 : i64, scratch_operands = 0 : i64, tpu.core_type = #tpu.core_type<tc>, window_params = [{transform_indices = @transform_0, window_bounds = array<i64: 16, 64>}, {pipeline_mode = #tpu.pipeline_mode<synchronous>, transform_indices = @transform_1, window_bounds = array<i64: 64, 128>}, {pipeline_mode = #tpu.pipeline_mode<synchronous>, transform_indices = @transform_2, window_bounds = array<i64: 1, 128>}, {pipeline_mode = #tpu.pipeline_mode<synchronous>, transform_indices = @transform_3, window_bounds = array<i64: 128, 64>}, {pipeline_mode = #tpu.pipeline_mode<synchronous>, transform_indices = @transform_4, window_bounds = array<i64: 1, 64>}, {transform_indices = @transform_5, window_bounds = array<i64: 16, 64>}]} {
    %c0 = arith.constant 0 : index
    %c0_0 = arith.constant 0 : index
    %0 = vector.load %arg1[%c0, %c0_0] : memref<16x64xf32, #tpu.memory_space<vmem>>, vector<16x64xf32>
    %1 = arith.truncf %0 : vector<16x64xf32> to vector<16x64xbf16>
    %c0_1 = arith.constant 0 : index
    %c0_2 = arith.constant 0 : index
    %2 = vector.load %arg2[%c0_1, %c0_2] : memref<64x128xbf16, #tpu.memory_space<vmem>>, vector<64x128xbf16>
    %cst = arith.constant dense<0.000000e+00> : vector<16x128xf32>
    %3 = tpu.matmul %1, %2, %cst {dimension_numbers = #tpu.dot_dimension_numbers<[1], [0], [0], [1], [0, 0, 1, 1], [], []>} : vector<16x64xbf16>, vector<64x128xbf16>, vector<16x128xf32> -> vector<16x128xf32>
    %c0_3 = arith.constant 0 : index
    %c0_4 = arith.constant 0 : index
    %4 = vector.load %arg3[%c0_3, %c0_4] : memref<1x128xf32, #tpu.memory_space<vmem>>, vector<1x128xf32>
    %5 = vector.broadcast %4 : vector<1x128xf32> to vector<16x128xf32>
    %6 = arith.addf %3, %5 : vector<16x128xf32>
    %cst_5 = arith.constant 0.000000e+00 : f32
    %7 = vector.broadcast %cst_5 : f32 to vector<16x128xf32>
    %8 = arith.maximumf %6, %7 : vector<16x128xf32>
    %9 = arith.truncf %8 : vector<16x128xf32> to vector<16x128xbf16>
    %c0_6 = arith.constant 0 : index
    %c0_7 = arith.constant 0 : index
    %10 = vector.load %arg4[%c0_6, %c0_7] : memref<128x64xbf16, #tpu.memory_space<vmem>>, vector<128x64xbf16>
    %cst_8 = arith.constant dense<0.000000e+00> : vector<16x64xf32>
    %11 = tpu.matmul %9, %10, %cst_8 {dimension_numbers = #tpu.dot_dimension_numbers<[1], [0], [0], [1], [0, 0, 1, 1], [], []>} : vector<16x128xbf16>, vector<128x64xbf16>, vector<16x64xf32> -> vector<16x64xf32>
    %c0_9 = arith.constant 0 : index
    %c0_10 = arith.constant 0 : index
    %12 = vector.load %arg5[%c0_9, %c0_10] : memref<1x64xf32, #tpu.memory_space<vmem>>, vector<1x64xf32>
    %13 = vector.broadcast %12 : vector<1x64xf32> to vector<16x64xf32>
    %14 = arith.addf %11, %13 : vector<16x64xf32>
    %c0_11 = arith.constant 0 : index
    %c0_12 = arith.constant 0 : index
    %15 = vector.load %arg6[%c0_11, %c0_12] : memref<16x64xf32, #tpu.memory_space<vmem>>, vector<16x64xf32>
    tpu.vector_store %arg6[%c0_11, %c0_12], %14 {strides = array<i32>} : memref<16x64xf32, #tpu.memory_space<vmem>>, vector<16x64xf32>,
    return
  }
  func.func @transform_0(%arg0: i32) -> (i32, i32) {
    %c0_i32 = arith.constant 0 : i32
    %c0_i32_0 = arith.constant 0 : i32
    return %arg0, %c0_i32 : i32, i32
  }
  func.func @transform_1(%arg0: i32) -> (i32, i32) {
    %c0_i32 = arith.constant 0 : i32
    %c0_i32_0 = arith.constant 0 : i32
    %c0_i32_1 = arith.constant 0 : i32
    return %c0_i32, %c0_i32_0 : i32, i32
  }
  func.func @transform_2(%arg0: i32) -> (i32, i32) {
    %c0_i32 = arith.constant 0 : i32
    %c0_i32_0 = arith.constant 0 : i32
    %c0_i32_1 = arith.constant 0 : i32
    return %c0_i32, %c0_i32_0 : i32, i32
  }
  func.func @transform_3(%arg0: i32) -> (i32, i32) {
    %c0_i32 = arith.constant 0 : i32
    %c0_i32_0 = arith.constant 0 : i32
    %c0_i32_1 = arith.constant 0 : i32
    return %c0_i32, %c0_i32_0 : i32, i32
  }
  func.func @transform_4(%arg0: i32) -> (i32, i32) {
    %c0_i32 = arith.constant 0 : i32
    %c0_i32_0 = arith.constant 0 : i32
    %c0_i32_1 = arith.constant 0 : i32
    return %c0_i32, %c0_i32_0 : i32, i32
  }
  func.func @transform_5(%arg0: i32) -> (i32, i32) {
    %c0_i32 = arith.constant 0 : i32
    %c0_i32_0 = arith.constant 0 : i32
    return %arg0, %c0_i32 : i32, i32
  }
}

</mosaic_0001>

<llo_original>
// kernel: tpu_custom_call.1
$region0: #{tpu_custom_call.1}
  #allocation0 [shape = 'u32[]', space=smem, size = 0x4, offset = 0x4, fixed_abs, tag = 'smem constant byte address 0x4 - core index']
  #allocation1 [shape = 'u32[144,128]{1,0:T(1,128)}', space=vmem, size = 0x12000, scoped, tag = 'internal scratch']
  %s0 = inlined_call_operand.vmem [shape: f32[16,64], index: 0, kind: input, shape index: {}]
  %s1 = inlined_call_operand.vmem [shape: bf16[64,128], index: 1, kind: input, shape index: {}]
  %s2 = inlined_call_operand.vmem [shape: f32[1,128], index: 2, kind: input, shape index: {}]
  %s3 = inlined_call_operand.vmem [shape: bf16[128,64], index: 3, kind: input, shape index: {}]
  %s4 = inlined_call_operand.vmem [shape: f32[1,64], index: 4, kind: input, shape index: {}]
  %s5 = inlined_call_operand.hbm [shape: f32[16,64], index: 5, kind: output, shape index: {}]
  %s6 = sld [smem:[#allocation0]]
  $region30: #{tpu_custom_call.1} parent=0
    _
  %s8 = ssub.s32 1, %s6
  %s9 = scalar_select 0, %s8, %s6
  $region1: #{tpu_custom_call.1} parent=0
    #allocation2 [shape = 'u8[8192]{0}', space=vmem, size = 0x2000, scoped, tag = 'output window, operand 0, single buffered']
    #allocation3 [shape = 's32[1]{0}', space=sflag, size = 0x4, scoped, tag = 'scoped memory for tpu_custom_call.1']
    %10 = vsyncpa [#allocation3], 0
    // Predicated region
    $region2: #{tpu_custom_call.1} parent=1 // pred_check
      _
    $region3: #{tpu_custom_call.1} parent=1 // pred_check_branch
      %12 = sbr.rel (0) target = $region5
    $region4: #{tpu_custom_call.1} parent=1 // pred_region
      _
    $region5: #{tpu_custom_call.1} parent=1 // pred_fallthru
      _
    // Predicated region
    $region6: #{tpu_custom_call.1} parent=1 // pred_check
      _
    $region7: #{tpu_custom_call.1} parent=1 // pred_check_branch
      %14 = sbr.rel (0) target = $region9
    $region8: #{tpu_custom_call.1} parent=1 // pred_region
      _
    $region9: #{tpu_custom_call.1} parent=1 // pred_fallthru
      _
    // Predicated region
    $region10: #{tpu_custom_call.1} parent=1 // pred_check
      _
    $region11: #{tpu_custom_call.1} parent=1 // pred_check_branch
      %16 = sbr.rel (0) target = $region13
    $region12: #{tpu_custom_call.1} parent=1 // pred_region
      _
    $region13: #{tpu_custom_call.1} parent=1 // pred_fallthru
      _
    // Predicated region
    $region14: #{tpu_custom_call.1} parent=1 // pred_check
      _
    $region15: #{tpu_custom_call.1} parent=1 // pred_check_branch
      %18 = sbr.rel (0) target = $region17
    $region16: #{tpu_custom_call.1} parent=1 // pred_region
      _
    $region17: #{tpu_custom_call.1} parent=1 // pred_fallthru
      _
    // Predicated region
    $region18: #{tpu_custom_call.1} parent=1 // pred_check
      _
    $region19: #{tpu_custom_call.1} parent=1 // pred_check_branch
      %20 = sbr.rel (0) target = $region21
    $region20: #{tpu_custom_call.1} parent=1 // pred_region
      _
    $region21: #{tpu_custom_call.1} parent=1 // pred_fallthru
      _
    %v22 = vld [vmem:[%s0] sm:$0xff]
    %v23 = vld [vmem:[%s0 + $0x8] sm:$0xff]
    %v24 = vpack.c.bf16 %v23, %v22
    %v25 = vld [vmem:[%s1] sm:$0xf]
    %v26 = vld [vmem:[%s1 + $0x4] sm:$0xf]
    %v27 = vld [vmem:[%s1 + $0x8] sm:$0xf]
    %v28 = vld [vmem:[%s1 + $0xc] sm:$0xf]
    %v29 = vld [vmem:[%s1 + $0x10] sm:$0xf]
    %v30 = vld [vmem:[%s1 + $0x14] sm:$0xf]
    %v31 = vld [vmem:[%s1 + $0x18] sm:$0xf]
    %v32 = vld [vmem:[%s1 + $0x1c] sm:$0xf]
    %v33 = vld [vmem:[%s2] sm:$0x1]
    %v35 = vlaneseq
    %v36 = vshrl.u32 %v35, 7
    %v37 = vsub.s32 0, %v36
    %v38 = vrot.slane %v33, %v37
    %v48 = vunpack.c.l.b16 %v25
    %v49 = vunpack.c.l.b16 %v26
    %v50 = vunpack.c.l.b16 %v27
    %v51 = vunpack.c.l.b16 %v28
    %v52 = vunpack.c.l.b16 %v29
    %v53 = vunpack.c.l.b16 %v30
    %v54 = vunpack.c.l.b16 %v31
    %v55 = vunpack.c.l.b16 %v32
    %v56 = vpack.c.b16 %v49, %v48
    %v57 = vpack.c.b16 %v51, %v50
    %v58 = vpack.c.b16 %v53, %v52
    %v59 = vpack.c.b16 %v55, %v54
    %vm64 = vcmask 523264
    %v66 = vsel %vm64, %v24, 0
    %68 = vmatprep.subr.bf16.mxu0 0
    %69 = vmatpush1.bf16.msra.mxu0 %v56
    %70 = vmatprep.subr.bf16.mxu0 0
    %71 = vmatpush1.bf16.msra.mxu0 %v57
    %72 = vmatprep.subr.bf16.mxu0 0
    %73 = vmatpush1.bf16.msra.mxu0 %v58
    %74 = vmatprep.subr.bf16.mxu0 0
    %75 = vmatpush1.bf16.msra.mxu0 %v59
    %76 = vmatprep.subr.bf16.mxu0 0
    %77 = vmatpush1.bf16.msra.mxu0 0
    %78 = vmatprep.subr.bf16.mxu0 0
    %79 = vmatpush1.bf16.msra.mxu0 0
    %80 = vmatprep.subr.bf16.mxu0 0
    %81 = vmatpush1.bf16.msra.mxu0 0
    %82 = vmatprep.subr.bf16.mxu0 0
    %83 = vmatpush1.bf16.msra.mxu0 0
    %84 = vmatprep.subr.bf16.mxu0 0
    %85 = vmatpush1.bf16.msra.mxu0 0
    %86 = vmatprep.subr.bf16.mxu0 0
    %87 = vmatpush1.bf16.msra.mxu0 0
    %88 = vmatprep.subr.bf16.mxu0 0
    %89 = vmatpush1.bf16.msra.mxu0 0
    %90 = vmatprep.subr.bf16.mxu0 0
    %91 = vmatpush1.bf16.msra.mxu0 0
    %92 = vmatprep.subr.bf16.mxu0 0
    %93 = vmatpush1.bf16.msra.mxu0 0
    %94 = vmatprep.subr.bf16.mxu0 0
    %95 = vmatpush1.bf16.msra.mxu0 0
    %96 = vmatprep.subr.bf16.mxu0 0
    %97 = vmatpush1.bf16.msra.mxu0 0
    %98 = vmatprep.subr.bf16.mxu0 0
    %99 = vmatpush1.bf16.msra.mxu0 0
    %100 = vmatprep.mubr.bf16.mxu0 0
    %101 = vmatmul.mubr.bf16.gmra.mrb[0].mxu0 %v66
    %v102 = vpop.f32.mrb[0].mxu0
    %v103 = vadd.f32 %v38, %v102
    %v104 = vpop.f32.mrb[0].mxu0
    %v105 = vpop.f32.mrb[0].mxu0
    %v106 = vadd.f32 %v38, %v105
    %v107 = vpop.f32.mrb[0].mxu0
    %108 = vdwg.mxu0
    %v109 = vmax.f32 %v103, 0.0
    %v110 = vmax.f32 %v106, 0.0
    %v111 = vpack.c.bf16 %v110, %v109
    %v112 = vld [vmem:[%s3] sm:$0xf]
    %v113 = vld [vmem:[%s3 + $0x4] sm:$0xf]
    %v114 = vld [vmem:[%s3 + $0x8] sm:$0xf]
    %v115 = vld [vmem:[%s3 + $0xc] sm:$0xf]
    %v116 = vld [vmem:[%s3 + $0x10] sm:$0xf]
    %v117 = vld [vmem:[%s3 + $0x14] sm:$0xf]
    %v118 = vld [vmem:[%s3 + $0x18] sm:$0xf]
    %v119 = vld [vmem:[%s3 + $0x1c] sm:$0xf]
    %v120 = vld [vmem:[%s3 + $0x20] sm:$0xf]
    %v121 = vld [vmem:[%s3 + $0x24] sm:$0xf]
    %v122 = vld [vmem:[%s3 + $0x28] sm:$0xf]
    %v123 = vld [vmem:[%s3 + $0x2c] sm:$0xf]
    %v124 = vld [vmem:[%s3 + $0x30] sm:$0xf]
    %v125 = vld [vmem:[%s3 + $0x34] sm:$0xf]
    %v126 = vld [vmem:[%s3 + $0x38] sm:$0xf]
    %v127 = vld [vmem:[%s3 + $0x3c] sm:$0xf]
    %v128 = vld [vmem:[%s4] sm:$0x1]
    %v130 = vlaneseq
    %v131 = vshrl.u32 %v130, 7
    %v132 = vsub.s32 0, %v131
    %v133 = vrot.slane %v128, %v132
    %v151 = vunpack.c.l.b16 %v112
    %v152 = vunpack.c.l.b16 %v113
    %v153 = vunpack.c.l.b16 %v114
    %v154 = vunpack.c.l.b16 %v115
    %v155 = vunpack.c.l.b16 %v116
    %v156 = vunpack.c.l.b16 %v117
    %v157 = vunpack.c.l.b16 %v118
    %v158 = vunpack.c.l.b16 %v119
    %v159 = vunpack.c.l.b16 %v120
    %v160 = vunpack.c.l.b16 %v121
    %v161 = vunpack.c.l.b16 %v122
    %v162 = vunpack.c.l.b16 %v123
    %v163 = vunpack.c.l.b16 %v124
    %v164 = vunpack.c.l.b16 %v125
    %v165 = vunpack.c.l.b16 %v126
    %v166 = vunpack.c.l.b16 %v127
    %v167 = vpack.c.b16 %v152, %v151
    %v168 = vpack.c.b16 %v154, %v153
    %v169 = vpack.c.b16 %v156, %v155
    %v170 = vpack.c.b16 %v158, %v157
    %v171 = vpack.c.b16 %v160, %v159
    %v172 = vpack.c.b16 %v162, %v161
    %v173 = vpack.c.b16 %v164, %v163
    %v174 = vpack.c.b16 %v166, %v165
    %183 = vmatprep.subr.bf16.mxu0 0
    %184 = vmatpush1.bf16.msra.mxu0 %v167
    %185 = vmatprep.subr.bf16.mxu0 0
    %186 = vmatpush1.bf16.msra.mxu0 %v168
    %187 = vmatprep.subr.bf16.mxu0 0
    %188 = vmatpush1.bf16.msra.mxu0 %v169
    %189 = vmatprep.subr.bf16.mxu0 0
    %190 = vmatpush1.bf16.msra.mxu0 %v170
    %191 = vmatprep.subr.bf16.mxu0 0
    %192 = vmatpush1.bf16.msra.mxu0 %v171
    %193 = vmatprep.subr.bf16.mxu0 0
    %194 = vmatpush1.bf16.msra.mxu0 %v172
    %195 = vmatprep.subr.bf16.mxu0 0
    %196 = vmatpush1.bf16.msra.mxu0 %v173
    %197 = vmatprep.subr.bf16.mxu0 0
    %198 = vmatpush1.bf16.msra.mxu0 %v174
    %199 = vmatprep.subr.bf16.mxu0 0
    %200 = vmatpush1.bf16.msra.mxu0 0
    %201 = vmatprep.subr.bf16.mxu0 0
    %202 = vmatpush1.bf16.msra.mxu0 0
    %203 = vmatprep.subr.bf16.mxu0 0
    %204 = vmatpush1.bf16.msra.mxu0 0
    %205 = vmatprep.subr.bf16.mxu0 0
    %206 = vmatpush1.bf16.msra.mxu0 0
    %207 = vmatprep.subr.bf16.mxu0 0
    %208 = vmatpush1.bf16.msra.mxu0 0
    %209 = vmatprep.subr.bf16.mxu0 0
    %210 = vmatpush1.bf16.msra.mxu0 0
    %211 = vmatprep.subr.bf16.mxu0 0
    %212 = vmatpush1.bf16.msra.mxu0 0
    %213 = vmatprep.subr.bf16.mxu0 0
    %214 = vmatpush1.bf16.msra.mxu0 0
    %215 = vmatprep.mubr.bf16.mxu0 0
    %216 = vmatmul.mubr.bf16.gmra.mrb[0].mxu0 %v111
    %v217 = vpop.f32.mrb[0].mxu0
    %v218 = vadd.f32 %v133, %v217
    %v219 = vpop.f32.mrb[0].mxu0
    %v220 = vpop.f32.mrb[0].mxu0
    %v221 = vadd.f32 %v133, %v220
    %v222 = vpop.f32.mrb[0].mxu0
    %223 = vdwg.mxu0
    %224 = vst.msk [vmem:[#allocation2] sm:$0xff] %vm64, %v218
    %225 = vst.msk [vmem:[#allocation2 + $0x8] sm:$0xff] %vm64, %v221
    // Predicated region
    $region22: #{tpu_custom_call.1} parent=1 // pred_check
      _
    $region23: #{tpu_custom_call.1} parent=1 // pred_check_branch
      %227 = sbr.rel (0) target = $region25
    $region24: #{tpu_custom_call.1} parent=1 // pred_region
      %s229 = ssub.s32 256, 256
      %230 = vsyncadd [#allocation3], %s229
      %s231 = sshll.u32 [#allocation2], 4
      %s232 = int_to_ptr.vmem [resolvable:$true] %s231
      %237 = dma.vmem_to_hbm [thread:$0]  %s232, 256, %s5, [#allocation3], 128, 128, 8
    $region25: #{tpu_custom_call.1} parent=1 // pred_fallthru
      _
    // Predicated region
    $region26: #{tpu_custom_call.1} parent=1 // pred_check
      _
    $region27: #{tpu_custom_call.1} parent=1 // pred_check_branch
      %239 = sbr.rel (0) target = $region29
    $region28: #{tpu_custom_call.1} parent=1 // pred_region
      %240 = dma.done [#allocation3], 256
    $region29: #{tpu_custom_call.1} parent=1 // pred_fallthru
      _
    %241 = vsyncpa [#allocation3], 1

</llo_original>
